<compile_context>
chip_gen: v6e
topology: v6e:2x2x1
jax: 0.10.0
libtpu: 0.0.40
codegen_flags: <defaults>
</compile_context>

<pallas_src>
import functools

import jax
import jax.numpy as jnp
from jax.experimental import pallas as pl
from jax.experimental.pallas import tpu as pltpu

_HID = 16     # hidden width fixed by MLPNet5
_LANE = 128   # TPU lane width


def mlp5_kernel(xt_ref, w_ref, b_ref, o_ref, *, n_input, n_classes, seg):
    """One batch tile of the fused fc1..fc5 forward.

    xt_ref: [n_input, tb]   activations, batch on the lane axis (MXU dtype)
    w_ref : [16, 5*seg]     packed weights, PyTorch [out, in] layout, layer l
                            starts at lane offset l*seg (seg is 128-aligned)
    b_ref : [16, 8] (f32)   packed biases, layer l in column l
    o_ref : [n_classes, tb] output tile (f32), lane-dense store
    """
    cdt = w_ref.dtype           # MXU operand dtype (bf16 by default)
    a = xt_ref[...]             # no cast: already streamed in the MXU dtype

    # fc1: [16, n_input] @ [n_input, tb] -> [16, tb], f32 accumulation
    h = jnp.dot(w_ref[:, 0:n_input], a, preferred_element_type=jnp.float32)
    h = jnp.maximum(h + b_ref[:, 0:1], 0.0)          # f32 bias + ReLU

    # fc2..fc4 (16x16), statically unrolled
    for l in range(1, 4):
        w = w_ref[:, l * seg:l * seg + _HID]
        h = jnp.dot(w, h.astype(cdt), preferred_element_type=jnp.float32)
        h = jnp.maximum(h + b_ref[:, l:l + 1], 0.0)

    # fc5 (no ReLU): [n_classes, 16] @ [16, tb] -> [n_classes, tb]
    w5 = w_ref[0:n_classes, 4 * seg:4 * seg + _HID]
    out = jnp.dot(w5, h.astype(cdt), preferred_element_type=jnp.float32)
    out = out + b_ref[0:n_classes, 4:5]
    o_ref[...] = out.astype(o_ref.dtype)


def _pack_params(params, n_input, n_classes, seg, mxu_dtype):
    """Pack the 5 weights into one lane-aligned slab and the 5 biases into one."""
    wslab = jnp.zeros((_HID, 5 * seg), jnp.float32)
    wslab = wslab.at[:, 0:n_input].set(params["w1"])
    wslab = wslab.at[:, 1 * seg:1 * seg + _HID].set(params["w2"])
    wslab = wslab.at[:, 2 * seg:2 * seg + _HID].set(params["w3"])
    wslab = wslab.at[:, 3 * seg:3 * seg + _HID].set(params["w4"])
    wslab = wslab.at[:n_classes, 4 * seg:4 * seg + _HID].set(params["w5"])

    bslab = jnp.zeros((_HID, 8), jnp.float32)
    for l in range(1, 5):
        bslab = bslab.at[:, l - 1].set(params[f"b{l}"])
    bslab = bslab.at[:n_classes, 4].set(params["b5"])
    return wslab.astype(mxu_dtype), bslab


def mlp5_forward(x, params, *, tb=1024, mxu_dtype=jnp.bfloat16):
    """x: [B, n_input] f32. params: PyTorch layout w{l}: [out, in], b{l}: [out]."""
    B, n_input = x.shape
    n_classes = params["w5"].shape[0]

    # 128-lane-aligned segment stride inside the weight slab.
    seg = ((max(n_input, _HID) + _LANE - 1) // _LANE) * _LANE
    wslab, bslab = _pack_params(params, n_input, n_classes, seg, mxu_dtype)

    # Batch tile: multiple of 128 lanes, as large as requested; pad B up to a
    # whole number of tiles (padded columns are sliced off after the call).
    tb_req = max(_LANE, (tb // _LANE) * _LANE)
    B_pad = ((B + _LANE - 1) // _LANE) * _LANE
    tb_eff = min(tb_req, B_pad)
    B_pad = ((B_pad + tb_eff - 1) // tb_eff) * tb_eff

    # Transposed, lane-dense, bf16-streamed input: [n_input, B_pad].
    xt = jnp.pad(x, ((0, B_pad - B), (0, 0))).T.astype(mxu_dtype)

    kernel = functools.partial(
        mlp5_kernel, n_input=n_input, n_classes=n_classes, seg=seg)

    out_t = pl.pallas_call(
        kernel,
        out_shape=jax.ShapeDtypeStruct((n_classes, B_pad), jnp.float32),
        grid=(B_pad // tb_eff,),
        in_specs=[
            pl.BlockSpec((n_input, tb_eff), lambda i: (0, i)),   # x tile
            pl.BlockSpec((_HID, 5 * seg), lambda i: (0, 0)),     # weight slab
            pl.BlockSpec((_HID, 8), lambda i: (0, 0)),           # bias slab
        ],
        out_specs=pl.BlockSpec((n_classes, tb_eff), lambda i: (0, i)),
        compiler_params=pltpu.CompilerParams(
            dimension_semantics=("parallel",)),   # shards tiles over v7x's 2 TCs
    )(xt, wslab, bslab)

    return out_t[:, :B].T   # back to [B, n_classes], f32


def init_params(key, n_input, n_classes):
    """PyTorch nn.Linear default init, PyTorch layout: w [out, in], b [out]."""
    dims = [(n_input, _HID), (_HID, _HID), (_HID, _HID), (_HID, _HID),
            (_HID, n_classes)]
    params = {}
    for idx, (fan_in, fan_out) in enumerate(dims, start=1):
        key, kw, kb = jax.random.split(key, 3)
        bound = 1.0 / (fan_in ** 0.5)
        params[f"w{idx}"] = jax.random.uniform(
            kw, (fan_out, fan_in), jnp.float32, -bound, bound)
        params[f"b{idx}"] = jax.random.uniform(
            kb, (fan_out,), jnp.float32, -bound, bound)
    return params


def reference_forward(x, params, cast_dtype=jnp.float32):
    """Pure-JAX reference. cast_dtype mirrors the kernel's MXU operand dtype."""
    h = x
    for l in range(1, 5):
        w = params[f"w{l}"].astype(cast_dtype)
        h = jnp.dot(h.astype(cast_dtype), w.T, preferred_element_type=jnp.float32)
        h = jnp.maximum(h + params[f"b{l}"], 0.0)
    w = params["w5"].astype(cast_dtype)
    return jnp.dot(h.astype(cast_dtype), w.T,
                   preferred_element_type=jnp.float32) + params["b5"]


if __name__ == "__main__":
    key = jax.random.PRNGKey(0)
    n_input, n_classes = 32, 8
    key, kx1, kx2, kp = jax.random.split(key, 4)
    params = init_params(kp, n_input, n_classes)

    # Case 1: small, non-lane-aligned batch -> padded to one 256-lane tile, grid=(1,).
    B1 = 200
    x1 = jax.random.normal(kx1, (B1, n_input), jnp.float32)
    out1 = jax.block_until_ready(mlp5_forward(x1, params))
    assert out1.shape == (B1, n_classes)
    ref1 = reference_forward(x1, params, cast_dtype=jnp.bfloat16)
    assert jnp.allclose(out1, ref1, atol=1e-4, rtol=1e-4)
    # sanity vs full-f32 math (bf16 MXU operands -> loose tolerance)
    ref1_f32 = reference_forward(x1, params)
    assert jnp.allclose(out1, ref1_f32, atol=5e-2, rtol=5e-2)

    # Case 2: multi-tile grid (two lane-dense 256-row tiles).
    B2 = 512
    x2 = jax.random.normal(kx2, (B2, n_input), jnp.float32)
    out2 = jax.block_until_ready(mlp5_forward(x2, params, tb=256))
    assert out2.shape == (B2, n_classes)
    ref2 = reference_forward(x2, params, cast_dtype=jnp.bfloat16)
    assert jnp.allclose(out2, ref2, atol=1e-4, rtol=1e-4)

    print("KERNEL_OK")
</pallas_src>

<mosaic_0001>
module attributes {stable_mosaic.version = 11 : i64} {
  func.func @mlp5_kernel(%arg0: i32, %arg1: memref<32x256xbf16, #tpu.memory_space<vmem>>, %arg2: memref<16x640xbf16, #tpu.memory_space<vmem>>, %arg3: memref<16x8xf32, #tpu.memory_space<vmem>>, %arg4: memref<8x256xf32, #tpu.memory_space<vmem>>) attributes {dimension_semantics = [#tpu.dimension_semantics<parallel>], iteration_bounds = array<i64: 1>, scalar_prefetch = 0 : i64, scratch_operands = 0 : i64, tpu.core_type = #tpu.core_type<tc>, window_params = [{transform_indices = @transform_0, window_bounds = array<i64: 32, 256>}, {pipeline_mode = #tpu.pipeline_mode<synchronous>, transform_indices = @transform_1, window_bounds = array<i64: 16, 640>}, {pipeline_mode = #tpu.pipeline_mode<synchronous>, transform_indices = @transform_2, window_bounds = array<i64: 16, 8>}, {transform_indices = @transform_3, window_bounds = array<i64: 8, 256>}]} {
    %c0 = arith.constant 0 : index
    %c0_0 = arith.constant 0 : index
    %0 = vector.load %arg1[%c0, %c0_0] : memref<32x256xbf16, #tpu.memory_space<vmem>>, vector<32x256xbf16>
    %c0_1 = arith.constant 0 : index
    %c0_2 = arith.constant 0 : index
    %1 = vector.load %arg2[%c0_1, %c0_2] : memref<16x640xbf16, #tpu.memory_space<vmem>>, vector<16x32xbf16>
    %cst = arith.constant dense<0.000000e+00> : vector<16x256xf32>
    %2 = tpu.matmul %1, %0, %cst {dimension_numbers = #tpu.dot_dimension_numbers<[1], [0], [0], [1], [0, 0, 1, 1], [], []>} : vector<16x32xbf16>, vector<32x256xbf16>, vector<16x256xf32> -> vector<16x256xf32>
    %c0_3 = arith.constant 0 : index
    %c0_4 = arith.constant 0 : index
    %3 = vector.load %arg3[%c0_3, %c0_4] : memref<16x8xf32, #tpu.memory_space<vmem>>, vector<16x1xf32>
    %4 = vector.broadcast %3 : vector<16x1xf32> to vector<16x256xf32>
    %5 = arith.addf %2, %4 : vector<16x256xf32>
    %cst_5 = arith.constant 0.000000e+00 : f32
    %6 = vector.broadcast %cst_5 : f32 to vector<16x256xf32>
    %7 = arith.maximumf %5, %6 : vector<16x256xf32>
    %c0_6 = arith.constant 0 : index
    %c128 = arith.constant 128 : index
    %8 = vector.load %arg2[%c0_6, %c128] : memref<16x640xbf16, #tpu.memory_space<vmem>>, vector<16x16xbf16>
    %9 = arith.truncf %7 : vector<16x256xf32> to vector<16x256xbf16>
    %cst_7 = arith.constant dense<0.000000e+00> : vector<16x256xf32>
    %10 = tpu.matmul %8, %9, %cst_7 {dimension_numbers = #tpu.dot_dimension_numbers<[1], [0], [0], [1], [0, 0, 1, 1], [], []>} : vector<16x16xbf16>, vector<16x256xbf16>, vector<16x256xf32> -> vector<16x256xf32>
    %c0_8 = arith.constant 0 : index
    %c1 = arith.constant 1 : index
    %11 = vector.load %arg3[%c0_8, %c1] : memref<16x8xf32, #tpu.memory_space<vmem>>, vector<16x1xf32>
    %12 = vector.broadcast %11 : vector<16x1xf32> to vector<16x256xf32>
    %13 = arith.addf %10, %12 : vector<16x256xf32>
    %cst_9 = arith.constant 0.000000e+00 : f32
    %14 = vector.broadcast %cst_9 : f32 to vector<16x256xf32>
    %15 = arith.maximumf %13, %14 : vector<16x256xf32>
    %c0_10 = arith.constant 0 : index
    %c256 = arith.constant 256 : index
    %16 = vector.load %arg2[%c0_10, %c256] : memref<16x640xbf16, #tpu.memory_space<vmem>>, vector<16x16xbf16>
    %17 = arith.truncf %15 : vector<16x256xf32> to vector<16x256xbf16>
    %cst_11 = arith.constant dense<0.000000e+00> : vector<16x256xf32>
    %18 = tpu.matmul %16, %17, %cst_11 {dimension_numbers = #tpu.dot_dimension_numbers<[1], [0], [0], [1], [0, 0, 1, 1], [], []>} : vector<16x16xbf16>, vector<16x256xbf16>, vector<16x256xf32> -> vector<16x256xf32>
    %c0_12 = arith.constant 0 : index
    %c2 = arith.constant 2 : index
    %19 = vector.load %arg3[%c0_12, %c2] : memref<16x8xf32, #tpu.memory_space<vmem>>, vector<16x1xf32>
    %20 = vector.broadcast %19 : vector<16x1xf32> to vector<16x256xf32>
    %21 = arith.addf %18, %20 : vector<16x256xf32>
    %cst_13 = arith.constant 0.000000e+00 : f32
    %22 = vector.broadcast %cst_13 : f32 to vector<16x256xf32>
    %23 = arith.maximumf %21, %22 : vector<16x256xf32>
    %c0_14 = arith.constant 0 : index
    %c384 = arith.constant 384 : index
    %24 = vector.load %arg2[%c0_14, %c384] : memref<16x640xbf16, #tpu.memory_space<vmem>>, vector<16x16xbf16>
    %25 = arith.truncf %23 : vector<16x256xf32> to vector<16x256xbf16>
    %cst_15 = arith.constant dense<0.000000e+00> : vector<16x256xf32>
    %26 = tpu.matmul %24, %25, %cst_15 {dimension_numbers = #tpu.dot_dimension_numbers<[1], [0], [0], [1], [0, 0, 1, 1], [], []>} : vector<16x16xbf16>, vector<16x256xbf16>, vector<16x256xf32> -> vector<16x256xf32>
    %c0_16 = arith.constant 0 : index
    %c3 = arith.constant 3 : index
    %27 = vector.load %arg3[%c0_16, %c3] : memref<16x8xf32, #tpu.memory_space<vmem>>, vector<16x1xf32>
    %28 = vector.broadcast %27 : vector<16x1xf32> to vector<16x256xf32>
    %29 = arith.addf %26, %28 : vector<16x256xf32>
    %cst_17 = arith.constant 0.000000e+00 : f32
    %30 = vector.broadcast %cst_17 : f32 to vector<16x256xf32>
    %31 = arith.maximumf %29, %30 : vector<16x256xf32>
    %c0_18 = arith.constant 0 : index
    %c512 = arith.constant 512 : index
    %32 = vector.load %arg2[%c0_18, %c512] : memref<16x640xbf16, #tpu.memory_space<vmem>>, vector<8x16xbf16>
    %33 = arith.truncf %31 : vector<16x256xf32> to vector<16x256xbf16>
    %cst_19 = arith.constant dense<0.000000e+00> : vector<8x256xf32>
    %34 = tpu.matmul %32, %33, %cst_19 {dimension_numbers = #tpu.dot_dimension_numbers<[1], [0], [0], [1], [0, 0, 1, 1], [], []>} : vector<8x16xbf16>, vector<16x256xbf16>, vector<8x256xf32> -> vector<8x256xf32>
    %c0_20 = arith.constant 0 : index
    %c4 = arith.constant 4 : index
    %35 = vector.load %arg3[%c0_20, %c4] : memref<16x8xf32, #tpu.memory_space<vmem>>, vector<8x1xf32>
    %36 = vector.broadcast %35 : vector<8x1xf32> to vector<8x256xf32>
    %37 = arith.addf %34, %36 : vector<8x256xf32>
    %c0_21 = arith.constant 0 : index
    %c0_22 = arith.constant 0 : index
    %38 = vector.load %arg4[%c0_21, %c0_22] : memref<8x256xf32, #tpu.memory_space<vmem>>, vector<8x256xf32>
    tpu.vector_store %arg4[%c0_21, %c0_22], %37 {strides = array<i32>} : memref<8x256xf32, #tpu.memory_space<vmem>>, vector<8x256xf32>,
    return
  }
  func.func @transform_0(%arg0: i32) -> (i32, i32) {
    %c0_i32 = arith.constant 0 : i32
    %c0_i32_0 = arith.constant 0 : i32
    return %c0_i32, %arg0 : i32, i32
  }
  func.func @transform_1(%arg0: i32) -> (i32, i32) {
    %c0_i32 = arith.constant 0 : i32
    %c0_i32_0 = arith.constant 0 : i32
    %c0_i32_1 = arith.constant 0 : i32
    return %c0_i32, %c0_i32_0 : i32, i32
  }
  func.func @transform_2(%arg0: i32) -> (i32, i32) {
    %c0_i32 = arith.constant 0 : i32
    %c0_i32_0 = arith.constant 0 : i32
    %c0_i32_1 = arith.constant 0 : i32
    return %c0_i32, %c0_i32_0 : i32, i32
  }
  func.func @transform_3(%arg0: i32) -> (i32, i32) {
    %c0_i32 = arith.constant 0 : i32
    %c0_i32_0 = arith.constant 0 : i32
    return %c0_i32, %arg0 : i32, i32
  }
}

</mosaic_0001>

<llo_original>
// kernel: tpu_custom_call.1
$region0: #{tpu_custom_call.1}
  #allocation0 [shape = 'u32[]', space=smem, size = 0x4, offset = 0x4, fixed_abs, tag = 'smem constant byte address 0x4 - core index']
  #allocation1 [shape = 'u32[144,128]{1,0:T(1,128)}', space=vmem, size = 0x12000, scoped, tag = 'internal scratch']
  %s0 = inlined_call_operand.hbm [shape: bf16[32,256], index: 0, kind: input, shape index: {}]
  %s1 = inlined_call_operand.hbm [shape: bf16[16,640], index: 1, kind: input, shape index: {}]
  %s2 = inlined_call_operand.vmem [shape: f32[16,8], index: 2, kind: input, shape index: {}]
  %s3 = inlined_call_operand.hbm [shape: f32[8,256], index: 3, kind: output, shape index: {}]
  %s4 = sld [smem:[#allocation0]]
  $region30: #{tpu_custom_call.1} parent=0
    _
  %s6 = ssub.s32 1, %s4
  %s7 = scalar_select 0, %s6, %s4
  $region1: #{tpu_custom_call.1} parent=0
    #allocation2 [shape = 'u8[16384]{0}', space=vmem, size = 0x4000, scoped, tag = 'input window, operand 0, single buffered']
    #allocation3 [shape = 's32[1]{0}', space=sflag, size = 0x4, scoped, tag = 'scoped memory for tpu_custom_call.1']
    #allocation4 [shape = 's32[1]{0}', space=sflag, size = 0x4, scoped, tag = 'scoped memory for tpu_custom_call.1']
    #allocation5 [shape = 'u8[20480]{0}', space=vmem, size = 0x5000, scoped, tag = 'input window, operand 1, single buffered']
    #allocation6 [shape = 's32[1]{0}', space=sflag, size = 0x4, scoped, tag = 'scoped memory for tpu_custom_call.1']
    #allocation7 [shape = 'u8[8192]{0}', space=vmem, size = 0x2000, scoped, tag = 'output window, operand 0, single buffered']
    %8 = vsyncpa [#allocation3], 0
    %9 = vsyncpa [#allocation6], 0
    %10 = vsyncpa [#allocation4], 0
    // Predicated region
    $region2: #{tpu_custom_call.1} parent=1 // pred_check
      _
    $region3: #{tpu_custom_call.1} parent=1 // pred_check_branch
      %12 = sbr.rel (0) target = $region5
    $region4: #{tpu_custom_call.1} parent=1 // pred_region
      %s14 = ssub.s32 512, 512
      %15 = vsyncadd [#allocation3], %s14
      %s16 = sshll.u32 [#allocation2], 4
      %s17 = int_to_ptr.vmem [resolvable:$true] %s16
      %22 = dma.hbm_to_vmem [thread:$0]  %s0, 512, %s17, [#allocation3], 128, 128, 8
    $region5: #{tpu_custom_call.1} parent=1 // pred_fallthru
      _
    // Predicated region
    $region6: #{tpu_custom_call.1} parent=1 // pred_check
      _
    $region7: #{tpu_custom_call.1} parent=1 // pred_check_branch
      %24 = sbr.rel (0) target = $region9
    $region8: #{tpu_custom_call.1} parent=1 // pred_region
      %s26 = ssub.s32 640, 640
      %27 = vsyncadd [#allocation6], %s26
      %s28 = sshll.u32 [#allocation5], 4
      %s29 = int_to_ptr.vmem [resolvable:$true] %s28
      %34 = dma.hbm_to_vmem [thread:$0]  %s1, 640, %s29, [#allocation6], 320, 320, 20
    $region9: #{tpu_custom_call.1} parent=1 // pred_fallthru
      _
    // Predicated region
    $region10: #{tpu_custom_call.1} parent=1 // pred_check
      _
    $region11: #{tpu_custom_call.1} parent=1 // pred_check_branch
      %36 = sbr.rel (0) target = $region13
    $region12: #{tpu_custom_call.1} parent=1 // pred_region
      _
    $region13: #{tpu_custom_call.1} parent=1 // pred_fallthru
      _
    // Predicated region
    $region14: #{tpu_custom_call.1} parent=1 // pred_check
      _
    $region15: #{tpu_custom_call.1} parent=1 // pred_check_branch
      %38 = sbr.rel (0) target = $region17
    $region16: #{tpu_custom_call.1} parent=1 // pred_region
      %39 = dma.done [#allocation3], 512
    $region17: #{tpu_custom_call.1} parent=1 // pred_fallthru
      _
    // Predicated region
    $region18: #{tpu_custom_call.1} parent=1 // pred_check
      _
    $region19: #{tpu_custom_call.1} parent=1 // pred_check_branch
      %41 = sbr.rel (0) target = $region21
    $region20: #{tpu_custom_call.1} parent=1 // pred_region
      %42 = dma.done [#allocation6], 640
    $region21: #{tpu_custom_call.1} parent=1 // pred_fallthru
      _
    %v44 = vld [vmem:[#allocation2] sm:$0xff]
    %v45 = vld [vmem:[#allocation2 + $0x8] sm:$0xff]
    %v46 = vld [vmem:[#allocation2 + $0x10] sm:$0xff]
    %v47 = vld [vmem:[#allocation2 + $0x18] sm:$0xff]
    %v48 = vld [vmem:[#allocation5] sm:$0xf]
    %v49 = vld [vmem:[#allocation5 + $0x14] sm:$0xf]
    %v50 = vld [vmem:[%s2] sm:$0xff]
    %v51 = vld [vmem:[%s2 + $0x8] sm:$0xff]
    %53 = vset.pattern.permute.xlu0 0
    %54 = vperm.xlu0 %53, %v50
    %v55 = vpop.permute.xlu0 %54
    %58 = vset.pattern.permute.xlu0 0
    %59 = vperm.xlu0 %58, %v51
    %v60 = vpop.permute.xlu0 %59
    %v64 = vunpack.c.l.b16 %v48
    %v65 = vunpack.c.l.b16 %v49
    %v66 = vpack.c.b16 %v65, %v64
    %v71 = vunpack.c.l.b16 %v44
    %v72 = vunpack.c.h.b16 %v44
    %v73 = vunpack.c.l.b16 %v45
    %v74 = vunpack.c.h.b16 %v45
    %v75 = vunpack.c.l.b16 %v46
    %v76 = vunpack.c.h.b16 %v46
    %v77 = vunpack.c.l.b16 %v47
    %v78 = vunpack.c.h.b16 %v47
    %v79 = vpack.c.b16 %v73, %v71
    %v80 = vpack.c.b16 %v74, %v72
    %v81 = vpack.c.b16 %v77, %v75
    %v82 = vpack.c.b16 %v78, %v76
    %vm87 = vcmask 261120
    %v89 = vsel %vm87, %v66, 0
    %91 = vmatprep.subr.bf16.mxu0 0
    %92 = vmatpush1.bf16.msra.mxu0 0
    %93 = vmatprep.subr.bf16.mxu0 0
    %94 = vmatpush1.bf16.msra.mxu0 0
    %95 = vmatprep.subr.bf16.mxu0 0
    %96 = vmatpush1.bf16.msra.mxu0 0
    %97 = vmatprep.subr.bf16.mxu0 0
    %98 = vmatpush1.bf16.msra.mxu0 0
    %99 = vmatprep.subr.bf16.mxu0 0
    %100 = vmatpush1.bf16.msra.mxu0 0
    %101 = vmatprep.subr.bf16.mxu0 0
    %102 = vmatpush1.bf16.msra.mxu0 0
    %103 = vmatprep.subr.bf16.mxu0 %v82
    %104 = vmatpush1.bf16.msra.mxu0 %v81
    %105 = vmatprep.subr.bf16.mxu0 %v80
    %106 = vmatpush1.bf16.msra.mxu0 %v79
    %107 = vmatprep.subr.bf16.mxu0 0
    %108 = vmatpush2.bf16.msra.mxu0 0
    %109 = vmatprep.subr.bf16.mxu0 0
    %110 = vmatpush2.bf16.msra.mxu0 0
    %111 = vmatprep.subr.bf16.mxu0 0
    %112 = vmatpush2.bf16.msra.mxu0 0
    %113 = vmatprep.subr.bf16.mxu0 0
    %114 = vmatpush2.bf16.msra.mxu0 0
    %115 = vmatprep.subr.bf16.mxu0 0
    %116 = vmatpush2.bf16.msra.mxu0 0
    %117 = vmatprep.subr.bf16.mxu0 0
    %118 = vmatpush2.bf16.msra.mxu0 0
    %119 = vmatprep.subr.bf16.mxu0 0
    %120 = vmatpush2.bf16.msra.mxu0 0
    %121 = vmatprep.subr.bf16.mxu0 0
    %122 = vmatpush2.bf16.msra.mxu0 0
    %123 = vmatprep.mubr.bf16.mxu0 0
    %124 = vmatmul.mubr.bf16.gmra.mxu0 %v89
    %v125 = vpop.f32.mrf.mxu0
    %v126 = vadd.f32 %v55, %v125
    %v127 = vpop.f32.mrf.mxu0
    %v128 = vadd.f32 %v55, %v127
    %v129 = vpop.f32.mrf.mxu0
    %v130 = vadd.f32 %v60, %v129
    %v131 = vpop.f32.mrf.mxu0
    %v132 = vadd.f32 %v60, %v131
    %133 = vdwg.mxu0
    %v134 = vmax.f32 %v126, 0.0
    %v135 = vmax.f32 %v128, 0.0
    %v136 = vmax.f32 %v130, 0.0
    %v137 = vmax.f32 %v132, 0.0
    %v138 = vld [vmem:[#allocation5 + $0x4] sm:$0xf]
    %v139 = vld [vmem:[#allocation5 + $0x18] sm:$0xf]
    %v140 = vpack.c.bf16 %v136, %v134
    %v141 = vpack.c.bf16 %v137, %v135
    %142 = vset.pattern.permute.xlu0 1
    %143 = vperm.xlu0 %142, %v50
    %v144 = vpop.permute.xlu0 %143
    %146 = vset.pattern.permute.xlu0 1
    %147 = vperm.xlu0 %146, %v51
    %v148 = vpop.permute.xlu0 %147
    %v152 = vunpack.c.l.b16 %v138
    %v153 = vunpack.c.l.b16 %v139
    %v154 = vpack.c.b16 %v153, %v152
    %vm155 = vcmask 130048
    %v157 = vsel %vm155, %v154, 0
    %159 = vmatprep.subr.bf16.mxu0 0
    %160 = vmatpush1.bf16.msra.mxu0 0
    %161 = vmatprep.subr.bf16.mxu0 0
    %162 = vmatpush1.bf16.msra.mxu0 0
    %163 = vmatprep.subr.bf16.mxu0 0
    %164 = vmatpush1.bf16.msra.mxu0 0
    %165 = vmatprep.subr.bf16.mxu0 0
    %166 = vmatpush1.bf16.msra.mxu0 0
    %167 = vmatprep.subr.bf16.mxu0 0
    %168 = vmatpush1.bf16.msra.mxu0 0
    %169 = vmatprep.subr.bf16.mxu0 0
    %170 = vmatpush1.bf16.msra.mxu0 0
    %171 = vmatprep.subr.bf16.mxu0 0
    %172 = vmatpush1.bf16.msra.mxu0 0
    %173 = vmatprep.subr.bf16.mxu0 %v141
    %174 = vmatpush1.bf16.msra.mxu0 %v140
    %175 = vmatprep.subr.bf16.mxu0 0
    %176 = vmatpush2.bf16.msra.mxu0 0
    %177 = vmatprep.subr.bf16.mxu0 0
    %178 = vmatpush2.bf16.msra.mxu0 0
    %179 = vmatprep.subr.bf16.mxu0 0
    %180 = vmatpush2.bf16.msra.mxu0 0
    %181 = vmatprep.subr.bf16.mxu0 0
    %182 = vmatpush2.bf16.msra.mxu0 0
    %183 = vmatprep.subr.bf16.mxu0 0
    %184 = vmatpush2.bf16.msra.mxu0 0
    %185 = vmatprep.subr.bf16.mxu0 0
    %186 = vmatpush2.bf16.msra.mxu0 0
    %187 = vmatprep.subr.bf16.mxu0 0
    %188 = vmatpush2.bf16.msra.mxu0 0
    %189 = vmatprep.subr.bf16.mxu0 0
    %190 = vmatpush2.bf16.msra.mxu0 0
    %191 = vmatprep.mubr.bf16.mxu0 0
    %192 = vmatmul.mubr.bf16.gmra.mxu0 %v157
    %v193 = vpop.f32.mrf.mxu0
    %v194 = vadd.f32 %v144, %v193
    %v195 = vpop.f32.mrf.mxu0
    %v196 = vadd.f32 %v144, %v195
    %v197 = vpop.f32.mrf.mxu0
    %v198 = vadd.f32 %v148, %v197
    %v199 = vpop.f32.mrf.mxu0
    %v200 = vadd.f32 %v148, %v199
    %201 = vdwg.mxu0
    %v202 = vmax.f32 %v194, 0.0
    %v203 = vmax.f32 %v196, 0.0
    %v204 = vmax.f32 %v198, 0.0
    %v205 = vmax.f32 %v200, 0.0
    %v206 = vld [vmem:[#allocation5 + $0x8] sm:$0xf]
    %v207 = vld [vmem:[#allocation5 + $0x1c] sm:$0xf]
    %v208 = vpack.c.bf16 %v204, %v202
    %v209 = vpack.c.bf16 %v205, %v203
    %210 = vset.pattern.permute.xlu0 2
    %211 = vperm.xlu0 %210, %v50
    %v212 = vpop.permute.xlu0 %211
    %214 = vset.pattern.permute.xlu0 2
    %215 = vperm.xlu0 %214, %v51
    %v216 = vpop.permute.xlu0 %215
    %v220 = vunpack.c.l.b16 %v206
    %v221 = vunpack.c.l.b16 %v207
    %v222 = vpack.c.b16 %v221, %v220
    %v224 = vsel %vm155, %v222, 0
    %226 = vmatprep.subr.bf16.mxu0 0
    %227 = vmatpush1.bf16.msra.mxu0 0
    %228 = vmatprep.subr.bf16.mxu0 0
    %229 = vmatpush1.bf16.msra.mxu0 0
    %230 = vmatprep.subr.bf16.mxu0 0
    %231 = vmatpush1.bf16.msra.mxu0 0
    %232 = vmatprep.subr.bf16.mxu0 0
    %233 = vmatpush1.bf16.msra.mxu0 0
    %234 = vmatprep.subr.bf16.mxu0 0
    %235 = vmatpush1.bf16.msra.mxu0 0
    %236 = vmatprep.subr.bf16.mxu0 0
    %237 = vmatpush1.bf16.msra.mxu0 0
    %238 = vmatprep.subr.bf16.mxu0 0
    %239 = vmatpush1.bf16.msra.mxu0 0
    %240 = vmatprep.subr.bf16.mxu0 %v209
    %241 = vmatpush1.bf16.msra.mxu0 %v208
    %242 = vmatprep.subr.bf16.mxu0 0
    %243 = vmatpush2.bf16.msra.mxu0 0
    %244 = vmatprep.subr.bf16.mxu0 0
    %245 = vmatpush2.bf16.msra.mxu0 0
    %246 = vmatprep.subr.bf16.mxu0 0
    %247 = vmatpush2.bf16.msra.mxu0 0
    %248 = vmatprep.subr.bf16.mxu0 0
    %249 = vmatpush2.bf16.msra.mxu0 0
    %250 = vmatprep.subr.bf16.mxu0 0
    %251 = vmatpush2.bf16.msra.mxu0 0
    %252 = vmatprep.subr.bf16.mxu0 0
    %253 = vmatpush2.bf16.msra.mxu0 0
    %254 = vmatprep.subr.bf16.mxu0 0
    %255 = vmatpush2.bf16.msra.mxu0 0
    %256 = vmatprep.subr.bf16.mxu0 0
    %257 = vmatpush2.bf16.msra.mxu0 0
    %258 = vmatprep.mubr.bf16.mxu0 0
    %259 = vmatmul.mubr.bf16.gmra.mxu0 %v224
    %v260 = vpop.f32.mrf.mxu0
    %v261 = vadd.f32 %v212, %v260
    %v262 = vpop.f32.mrf.mxu0
    %v263 = vadd.f32 %v212, %v262
    %v264 = vpop.f32.mrf.mxu0
    %v265 = vadd.f32 %v216, %v264
    %v266 = vpop.f32.mrf.mxu0
    %v267 = vadd.f32 %v216, %v266
    %268 = vdwg.mxu0
    %v269 = vmax.f32 %v261, 0.0
    %v270 = vmax.f32 %v263, 0.0
    %v271 = vmax.f32 %v265, 0.0
    %v272 = vmax.f32 %v267, 0.0
    %v273 = vld [vmem:[#allocation5 + $0xc] sm:$0xf]
    %v274 = vld [vmem:[#allocation5 + $0x20] sm:$0xf]
    %v275 = vpack.c.bf16 %v271, %v269
    %v276 = vpack.c.bf16 %v272, %v270
    %277 = vset.pattern.permute.xlu0 3
    %278 = vperm.xlu0 %277, %v50
    %v279 = vpop.permute.xlu0 %278
    %281 = vset.pattern.permute.xlu0 3
    %282 = vperm.xlu0 %281, %v51
    %v283 = vpop.permute.xlu0 %282
    %v287 = vunpack.c.l.b16 %v273
    %v288 = vunpack.c.l.b16 %v274
    %v289 = vpack.c.b16 %v288, %v287
    %v291 = vsel %vm155, %v289, 0
    %293 = vmatprep.subr.bf16.mxu0 0
    %294 = vmatpush1.bf16.msra.mxu0 0
    %295 = vmatprep.subr.bf16.mxu0 0
    %296 = vmatpush1.bf16.msra.mxu0 0
    %297 = vmatprep.subr.bf16.mxu0 0
    %298 = vmatpush1.bf16.msra.mxu0 0
    %299 = vmatprep.subr.bf16.mxu0 0
    %300 = vmatpush1.bf16.msra.mxu0 0
    %301 = vmatprep.subr.bf16.mxu0 0
    %302 = vmatpush1.bf16.msra.mxu0 0
    %303 = vmatprep.subr.bf16.mxu0 0
    %304 = vmatpush1.bf16.msra.mxu0 0
    %305 = vmatprep.subr.bf16.mxu0 0
    %306 = vmatpush1.bf16.msra.mxu0 0
    %307 = vmatprep.subr.bf16.mxu0 %v276
    %308 = vmatpush1.bf16.msra.mxu0 %v275
    %309 = vmatprep.subr.bf16.mxu0 0
    %310 = vmatpush2.bf16.msra.mxu0 0
    %311 = vmatprep.subr.bf16.mxu0 0
    %312 = vmatpush2.bf16.msra.mxu0 0
    %313 = vmatprep.subr.bf16.mxu0 0
    %314 = vmatpush2.bf16.msra.mxu0 0
    %315 = vmatprep.subr.bf16.mxu0 0
    %316 = vmatpush2.bf16.msra.mxu0 0
    %317 = vmatprep.subr.bf16.mxu0 0
    %318 = vmatpush2.bf16.msra.mxu0 0
    %319 = vmatprep.subr.bf16.mxu0 0
    %320 = vmatpush2.bf16.msra.mxu0 0
    %321 = vmatprep.subr.bf16.mxu0 0
    %322 = vmatpush2.bf16.msra.mxu0 0
    %323 = vmatprep.subr.bf16.mxu0 0
    %324 = vmatpush2.bf16.msra.mxu0 0
    %325 = vmatprep.mubr.bf16.mxu0 0
    %326 = vmatmul.mubr.bf16.gmra.mxu0 %v291
    %v327 = vpop.f32.mrf.mxu0
    %v328 = vadd.f32 %v279, %v327
    %v329 = vpop.f32.mrf.mxu0
    %v330 = vadd.f32 %v279, %v329
    %v331 = vpop.f32.mrf.mxu0
    %v332 = vadd.f32 %v283, %v331
    %v333 = vpop.f32.mrf.mxu0
    %v334 = vadd.f32 %v283, %v333
    %335 = vdwg.mxu0
    %v336 = vmax.f32 %v328, 0.0
    %v337 = vmax.f32 %v330, 0.0
    %v338 = vmax.f32 %v332, 0.0
    %v339 = vmax.f32 %v334, 0.0
    %v340 = vld [vmem:[#allocation5 + $0x10] sm:$0xf]
    %v341 = vpack.c.bf16 %v338, %v336
    %v342 = vpack.c.bf16 %v339, %v337
    %v343 = vld [vmem:[%s2] sm:$0xff]
    %345 = vset.pattern.permute.xlu0 4
    %346 = vperm.xlu0 %345, %v343
    %v347 = vpop.permute.xlu0 %346
    %v350 = vsel %vm155, %v340, 0
    %352 = vmatprep.subr.bf16.mxu0 0
    %353 = vmatpush1.bf16.msra.mxu0 0
    %354 = vmatprep.subr.bf16.mxu0 0
    %355 = vmatpush1.bf16.msra.mxu0 0
    %356 = vmatprep.subr.bf16.mxu0 0
    %357 = vmatpush1.bf16.msra.mxu0 0
    %358 = vmatprep.subr.bf16.mxu0 0
    %359 = vmatpush1.bf16.msra.mxu0 0
    %360 = vmatprep.subr.bf16.mxu0 0
    %361 = vmatpush1.bf16.msra.mxu0 0
    %362 = vmatprep.subr.bf16.mxu0 0
    %363 = vmatpush1.bf16.msra.mxu0 0
    %364 = vmatprep.subr.bf16.mxu0 0
    %365 = vmatpush1.bf16.msra.mxu0 0
    %366 = vmatprep.subr.bf16.mxu0 %v342
    %367 = vmatpush1.bf16.msra.mxu0 %v341
    %368 = vmatprep.subr.bf16.mxu0 0
    %369 = vmatpush2.bf16.msra.mxu0 0
    %370 = vmatprep.subr.bf16.mxu0 0
    %371 = vmatpush2.bf16.msra.mxu0 0
    %372 = vmatprep.subr.bf16.mxu0 0
    %373 = vmatpush2.bf16.msra.mxu0 0
    %374 = vmatprep.subr.bf16.mxu0 0
    %375 = vmatpush2.bf16.msra.mxu0 0
    %376 = vmatprep.subr.bf16.mxu0 0
    %377 = vmatpush2.bf16.msra.mxu0 0
    %378 = vmatprep.subr.bf16.mxu0 0
    %379 = vmatpush2.bf16.msra.mxu0 0
    %380 = vmatprep.subr.bf16.mxu0 0
    %381 = vmatpush2.bf16.msra.mxu0 0
    %382 = vmatprep.subr.bf16.mxu0 0
    %383 = vmatpush2.bf16.msra.mxu0 0
    %384 = vmatprep.mubr.bf16.mxu0 0
    %385 = vmatmul.mubr.bf16.gmra.mxu0 %v350
    %v386 = vpop.f32.mrf.mxu0
    %v387 = vadd.f32 %v347, %v386
    %v388 = vpop.f32.mrf.mxu0
    %v389 = vadd.f32 %v347, %v388
    %v390 = vpop.f32.mrf.mxu0
    %v391 = vpop.f32.mrf.mxu0
    %392 = vdwg.mxu0
    %393 = vst [vmem:[#allocation7] sm:$0xff] %v387
    %394 = vst [vmem:[#allocation7 + $0x8] sm:$0xff] %v389
    // Predicated region
    $region22: #{tpu_custom_call.1} parent=1 // pred_check
      _
    $region23: #{tpu_custom_call.1} parent=1 // pred_check_branch
      %396 = sbr.rel (0) target = $region25
    $region24: #{tpu_custom_call.1} parent=1 // pred_region
      %s398 = ssub.s32 256, 256
      %399 = vsyncadd [#allocation4], %s398
      %s401 = sshll.u32 [#allocation7], 4
      %s402 = int_to_ptr.vmem [resolvable:$true] %s401
      %404 = dma.vmem_to_hbm [thread:$0]  %s402, 256, %s3, [#allocation4]
    $region25: #{tpu_custom_call.1} parent=1 // pred_fallthru
      _
    // Predicated region
    $region26: #{tpu_custom_call.1} parent=1 // pred_check
      _
    $region27: #{tpu_custom_call.1} parent=1 // pred_check_branch
      %406 = sbr.rel (0) target = $region29
    $region28: #{tpu_custom_call.1} parent=1 // pred_region
      %407 = dma.done [#allocation4], 256
    $region29: #{tpu_custom_call.1} parent=1 // pred_fallthru
      _
    %408 = vsyncpa [#allocation3], 1
    %409 = vsyncpa [#allocation6], 1
    %410 = vsyncpa [#allocation4], 1

</llo_original>
